<compile_context>
chip_gen: v7x
topology: tpu7x:2x2x1
jax: 0.10.0
libtpu: 0.0.40
codegen_flags: <defaults>
</compile_context>

<pallas_src>
import jax
import jax.numpy as jnp
from jax.experimental import pallas as pl
from jax.experimental.pallas import tpu as pltpu


def _round_up(n: int, m: int) -> int:
    return ((n + m - 1) // m) * m


def _mlp_kernel(x_ref, w1_ref, b1_ref, w2_ref, b2_ref,
                w3_ref, b3_ref, w4_ref, b4_ref, o_ref):
    # Layer 1: bf16 x bf16 MXU matmul, f32 accumulate; bias + ReLU in f32 (VPU).
    h = jnp.dot(x_ref[...], w1_ref[...], preferred_element_type=jnp.float32)
    h = jnp.maximum(h + b1_ref[...], 0.0)
    # TODO(synk): Dropout(p=0.1) is identity here (eval-mode forward); a
    # training-mode kernel would draw a per-tile mask with pltpu.prng_*.

    # Layers 2-3: cast the f32 accumulator back to bf16 so the MXU stays on its
    # native bf16 path; elementwise math stays f32 (no bf16 VPU/EUP on v5e).
    h = jnp.dot(h.astype(jnp.bfloat16), w2_ref[...],
                preferred_element_type=jnp.float32)
    h = jnp.maximum(h + b2_ref[...], 0.0)

    h = jnp.dot(h.astype(jnp.bfloat16), w3_ref[...],
                preferred_element_type=jnp.float32)
    h = jnp.maximum(h + b3_ref[...], 0.0)

    # Layer 4: Linear + Sigmoid (exp and approx reciprocal both on the EUP slot).
    z = jnp.dot(h.astype(jnp.bfloat16), w4_ref[...],
                preferred_element_type=jnp.float32) + b4_ref[...]
    o_ref[...] = pl.reciprocal(1.0 + jnp.exp(-z), approx=True).astype(o_ref.dtype)


def prepare_params(weights, biases):
    """One-time parameter prep.

    PyTorch-layout (out, in) weights are transposed to (in_p, out_p), every
    feature dim is padded to a 128-lane multiple, and weights are stored in
    bf16 (halves HBM/VMEM bytes; MXU is native bf16). Biases stay f32 since
    the bias add / activation run in f32 on the VPU.
    """
    # TODO(synk): on v7x the dominant layer-1 weight could additionally be
    # stored fp8 with a per-channel scale for another 2x DMA reduction.
    prepared = []
    for w, b in zip(weights, biases):
        out_dim, in_dim = w.shape
        in_p = _round_up(in_dim, 128)
        out_p = _round_up(out_dim, 128)
        w_t = (jnp.zeros((in_p, out_p), jnp.float32)
               .at[:in_dim, :out_dim].set(jnp.asarray(w, jnp.float32).T)
               .astype(jnp.bfloat16))
        b_p = (jnp.zeros((1, out_p), jnp.float32)
               .at[0, :out_dim].set(jnp.asarray(b, jnp.float32)))
        prepared.append((w_t, b_p))
    return prepared


def classification_forward(x, prepared_params, num_classes):
    """Forward pass of ClassificationModule (eval mode) via one fused kernel."""
    batch = x.shape[0]
    x2d = x.reshape(batch, -1).astype(jnp.bfloat16)     # nn.Flatten + bf16 cast
    in_dim = x2d.shape[1]

    (w1, b1), (w2, b2), (w3, b3), (w4, b4) = prepared_params
    in_p = w1.shape[0]
    h1, h2, h3 = w1.shape[1], w2.shape[1], w3.shape[1]
    out_p = w4.shape[1]

    # Pad the feature dim only when it is not already a lane multiple (1024 is);
    # the batch dim is never padded.
    if in_dim != in_p:
        x2d = jnp.pad(x2d, ((0, 0), (0, in_p - in_dim)))

    # Batch tiling: large tiles amortize per-grid-step pipeline overhead.
    # Small batches: one full-dim tile (block dim == array dim is always legal).
    # Large batches: 512-row tiles; Pallas masks the partial last tile.
    TM_CAP = 512
    tm = batch if batch <= TM_CAP else TM_CAP
    grid_m = pl.cdiv(batch, tm)

    full = lambda i: (0, 0)          # weights/biases: single resident VMEM block
    row = lambda i: (i, 0)           # x / output: tiled along the batch axis

    out = pl.pallas_call(
        _mlp_kernel,
        out_shape=jax.ShapeDtypeStruct((batch, out_p), jnp.float32),
        grid_spec=pl.GridSpec(
            grid=(grid_m,),
            in_specs=[
                pl.BlockSpec((tm, in_p), row),
                pl.BlockSpec((in_p, h1), full), pl.BlockSpec((1, h1), full),
                pl.BlockSpec((h1, h2), full), pl.BlockSpec((1, h2), full),
                pl.BlockSpec((h2, h3), full), pl.BlockSpec((1, h3), full),
                pl.BlockSpec((h3, out_p), full), pl.BlockSpec((1, out_p), full),
            ],
            out_specs=pl.BlockSpec((tm, out_p), row),
        ),
        compiler_params=pltpu.CompilerParams(
            dimension_semantics=("parallel",),        # 2 TCs on v7x split batch
            vmem_limit_bytes=32 * 1024 * 1024,        # safe on v7x's 64 MiB VMEM
        ),
    )(x2d, w1, b1, w2, b2, w3, b3, w4, b4)

    # Strip the lane padding of the class dimension (padded cols = sigmoid(0)).
    return out[:, :num_classes]


if __name__ == "__main__":
    key = jax.random.PRNGKey(0)
    keys = jax.random.split(key, 9)

    # Small shapes consistent with the module: Flatten of (4,16,16) -> 1024.
    batch, c, h, w = 2, 4, 16, 16
    input_size = c * h * w
    num_classes = 10

    x = jax.random.normal(keys[0], (batch, c, h, w), dtype=jnp.float32)

    # PyTorch-layout parameters: weight (out, in), bias (out,).
    dims = [(input_size, 256), (256, 128), (128, 64), (64, num_classes)]
    weights, biases = [], []
    for li, (din, dout) in enumerate(dims):
        bound = 1.0 / (din ** 0.5)
        weights.append(jax.random.uniform(
            keys[1 + 2 * li], (dout, din), minval=-bound, maxval=bound,
            dtype=jnp.float32))
        biases.append(jax.random.uniform(
            keys[2 + 2 * li], (dout,), minval=-bound, maxval=bound,
            dtype=jnp.float32))

    params = prepare_params(weights, biases)     # one-time pad + transpose + bf16
    out = classification_forward(x, params, num_classes)
    jax.block_until_ready(out)

    # Pure-JAX f32 reference (eval-mode forward: dropout = identity).
    ref = x.reshape(batch, -1)
    for li in range(3):
        ref = jnp.maximum(ref @ weights[li].T + biases[li], 0.0)
    ref = 1.0 / (1.0 + jnp.exp(-(ref @ weights[3].T + biases[3])))

    assert out.shape == (batch, num_classes)
    # bf16 weights/inputs -> loosened tolerance vs the f32 reference.
    err = float(jnp.max(jnp.abs(out - ref)))
    assert jnp.allclose(out, ref, atol=2e-2, rtol=2e-2), err

    print("KERNEL_OK")
</pallas_src>

<mosaic_0001>
module attributes {stable_mosaic.version = 11 : i64} {
  func.func @_mlp_kernel(%arg0: i32, %arg1: memref<2x1024xbf16, #tpu.memory_space<vmem>>, %arg2: memref<1024x256xbf16, #tpu.memory_space<vmem>>, %arg3: memref<1x256xf32, #tpu.memory_space<vmem>>, %arg4: memref<256x128xbf16, #tpu.memory_space<vmem>>, %arg5: memref<1x128xf32, #tpu.memory_space<vmem>>, %arg6: memref<128x128xbf16, #tpu.memory_space<vmem>>, %arg7: memref<1x128xf32, #tpu.memory_space<vmem>>, %arg8: memref<128x128xbf16, #tpu.memory_space<vmem>>, %arg9: memref<1x128xf32, #tpu.memory_space<vmem>>, %arg10: memref<2x128xf32, #tpu.memory_space<vmem>>) attributes {dimension_semantics = [#tpu.dimension_semantics<parallel>], iteration_bounds = array<i64: 1>, scalar_prefetch = 0 : i64, scratch_operands = 0 : i64, tpu.core_type = #tpu.core_type<tc>, window_params = [{transform_indices = @transform_0, window_bounds = array<i64: 2, 1024>}, {pipeline_mode = #tpu.pipeline_mode<synchronous>, transform_indices = @transform_1, window_bounds = array<i64: 1024, 256>}, {pipeline_mode = #tpu.pipeline_mode<synchronous>, transform_indices = @transform_2, window_bounds = array<i64: 1, 256>}, {pipeline_mode = #tpu.pipeline_mode<synchronous>, transform_indices = @transform_3, window_bounds = array<i64: 256, 128>}, {pipeline_mode = #tpu.pipeline_mode<synchronous>, transform_indices = @transform_4, window_bounds = array<i64: 1, 128>}, {pipeline_mode = #tpu.pipeline_mode<synchronous>, transform_indices = @transform_5, window_bounds = array<i64: 128, 128>}, {pipeline_mode = #tpu.pipeline_mode<synchronous>, transform_indices = @transform_6, window_bounds = array<i64: 1, 128>}, {pipeline_mode = #tpu.pipeline_mode<synchronous>, transform_indices = @transform_7, window_bounds = array<i64: 128, 128>}, {pipeline_mode = #tpu.pipeline_mode<synchronous>, transform_indices = @transform_8, window_bounds = array<i64: 1, 128>}, {transform_indices = @transform_9, window_bounds = array<i64: 2, 128>}]} {
    %c0 = arith.constant 0 : index
    %c0_0 = arith.constant 0 : index
    %0 = vector.load %arg1[%c0, %c0_0] : memref<2x1024xbf16, #tpu.memory_space<vmem>>, vector<2x1024xbf16>
    %c0_1 = arith.constant 0 : index
    %c0_2 = arith.constant 0 : index
    %1 = vector.load %arg2[%c0_1, %c0_2] : memref<1024x256xbf16, #tpu.memory_space<vmem>>, vector<1024x256xbf16>
    %cst = arith.constant dense<0.000000e+00> : vector<2x256xf32>
    %2 = tpu.matmul %0, %1, %cst {dimension_numbers = #tpu.dot_dimension_numbers<[1], [0], [0], [1], [0, 0, 1, 1], [], []>} : vector<2x1024xbf16>, vector<1024x256xbf16>, vector<2x256xf32> -> vector<2x256xf32>
    %c0_3 = arith.constant 0 : index
    %c0_4 = arith.constant 0 : index
    %3 = vector.load %arg3[%c0_3, %c0_4] : memref<1x256xf32, #tpu.memory_space<vmem>>, vector<1x256xf32>
    %4 = vector.broadcast %3 : vector<1x256xf32> to vector<2x256xf32>
    %5 = arith.addf %2, %4 : vector<2x256xf32>
    %cst_5 = arith.constant 0.000000e+00 : f32
    %6 = vector.broadcast %cst_5 : f32 to vector<2x256xf32>
    %7 = arith.maximumf %5, %6 : vector<2x256xf32>
    %8 = arith.truncf %7 : vector<2x256xf32> to vector<2x256xbf16>
    %c0_6 = arith.constant 0 : index
    %c0_7 = arith.constant 0 : index
    %9 = vector.load %arg4[%c0_6, %c0_7] : memref<256x128xbf16, #tpu.memory_space<vmem>>, vector<256x128xbf16>
    %cst_8 = arith.constant dense<0.000000e+00> : vector<2x128xf32>
    %10 = tpu.matmul %8, %9, %cst_8 {dimension_numbers = #tpu.dot_dimension_numbers<[1], [0], [0], [1], [0, 0, 1, 1], [], []>} : vector<2x256xbf16>, vector<256x128xbf16>, vector<2x128xf32> -> vector<2x128xf32>
    %c0_9 = arith.constant 0 : index
    %c0_10 = arith.constant 0 : index
    %11 = vector.load %arg5[%c0_9, %c0_10] : memref<1x128xf32, #tpu.memory_space<vmem>>, vector<1x128xf32>
    %12 = vector.broadcast %11 : vector<1x128xf32> to vector<2x128xf32>
    %13 = arith.addf %10, %12 : vector<2x128xf32>
    %cst_11 = arith.constant 0.000000e+00 : f32
    %14 = vector.broadcast %cst_11 : f32 to vector<2x128xf32>
    %15 = arith.maximumf %13, %14 : vector<2x128xf32>
    %16 = arith.truncf %15 : vector<2x128xf32> to vector<2x128xbf16>
    %c0_12 = arith.constant 0 : index
    %c0_13 = arith.constant 0 : index
    %17 = vector.load %arg6[%c0_12, %c0_13] : memref<128x128xbf16, #tpu.memory_space<vmem>>, vector<128x128xbf16>
    %cst_14 = arith.constant dense<0.000000e+00> : vector<2x128xf32>
    %18 = tpu.matmul %16, %17, %cst_14 {dimension_numbers = #tpu.dot_dimension_numbers<[1], [0], [0], [1], [0, 0, 1, 1], [], []>} : vector<2x128xbf16>, vector<128x128xbf16>, vector<2x128xf32> -> vector<2x128xf32>
    %c0_15 = arith.constant 0 : index
    %c0_16 = arith.constant 0 : index
    %19 = vector.load %arg7[%c0_15, %c0_16] : memref<1x128xf32, #tpu.memory_space<vmem>>, vector<1x128xf32>
    %20 = vector.broadcast %19 : vector<1x128xf32> to vector<2x128xf32>
    %21 = arith.addf %18, %20 : vector<2x128xf32>
    %cst_17 = arith.constant 0.000000e+00 : f32
    %22 = vector.broadcast %cst_17 : f32 to vector<2x128xf32>
    %23 = arith.maximumf %21, %22 : vector<2x128xf32>
    %24 = arith.truncf %23 : vector<2x128xf32> to vector<2x128xbf16>
    %c0_18 = arith.constant 0 : index
    %c0_19 = arith.constant 0 : index
    %25 = vector.load %arg8[%c0_18, %c0_19] : memref<128x128xbf16, #tpu.memory_space<vmem>>, vector<128x128xbf16>
    %cst_20 = arith.constant dense<0.000000e+00> : vector<2x128xf32>
    %26 = tpu.matmul %24, %25, %cst_20 {dimension_numbers = #tpu.dot_dimension_numbers<[1], [0], [0], [1], [0, 0, 1, 1], [], []>} : vector<2x128xbf16>, vector<128x128xbf16>, vector<2x128xf32> -> vector<2x128xf32>
    %c0_21 = arith.constant 0 : index
    %c0_22 = arith.constant 0 : index
    %27 = vector.load %arg9[%c0_21, %c0_22] : memref<1x128xf32, #tpu.memory_space<vmem>>, vector<1x128xf32>
    %28 = vector.broadcast %27 : vector<1x128xf32> to vector<2x128xf32>
    %29 = arith.addf %26, %28 : vector<2x128xf32>
    %cst_23 = arith.constant 0.000000e+00 : f32
    %30 = vector.broadcast %cst_23 : f32 to vector<2x128xf32>
    %31 = arith.subf %30, %29 : vector<2x128xf32>
    %32 = math.exp %31 : vector<2x128xf32>
    %cst_24 = arith.constant 1.000000e+00 : f32
    %33 = vector.broadcast %cst_24 : f32 to vector<2x128xf32>
    %34 = arith.addf %33, %32 : vector<2x128xf32>
    %35 = tpu.reciprocal %34 {approx = true} : vector<2x128xf32> -> vector<2x128xf32>
    %c0_25 = arith.constant 0 : index
    %c0_26 = arith.constant 0 : index
    %36 = vector.load %arg10[%c0_25, %c0_26] : memref<2x128xf32, #tpu.memory_space<vmem>>, vector<2x128xf32>
    tpu.vector_store %arg10[%c0_25, %c0_26], %35 {strides = array<i32>} : memref<2x128xf32, #tpu.memory_space<vmem>>, vector<2x128xf32>,
    return
  }
  func.func @transform_0(%arg0: i32) -> (i32, i32) {
    %c0_i32 = arith.constant 0 : i32
    %c0_i32_0 = arith.constant 0 : i32
    return %arg0, %c0_i32 : i32, i32
  }
  func.func @transform_1(%arg0: i32) -> (i32, i32) {
    %c0_i32 = arith.constant 0 : i32
    %c0_i32_0 = arith.constant 0 : i32
    %c0_i32_1 = arith.constant 0 : i32
    return %c0_i32, %c0_i32_0 : i32, i32
  }
  func.func @transform_2(%arg0: i32) -> (i32, i32) {
    %c0_i32 = arith.constant 0 : i32
    %c0_i32_0 = arith.constant 0 : i32
    %c0_i32_1 = arith.constant 0 : i32
    return %c0_i32, %c0_i32_0 : i32, i32
  }
  func.func @transform_3(%arg0: i32) -> (i32, i32) {
    %c0_i32 = arith.constant 0 : i32
    %c0_i32_0 = arith.constant 0 : i32
    %c0_i32_1 = arith.constant 0 : i32
    return %c0_i32, %c0_i32_0 : i32, i32
  }
  func.func @transform_4(%arg0: i32) -> (i32, i32) {
    %c0_i32 = arith.constant 0 : i32
    %c0_i32_0 = arith.constant 0 : i32
    %c0_i32_1 = arith.constant 0 : i32
    return %c0_i32, %c0_i32_0 : i32, i32
  }
  func.func @transform_5(%arg0: i32) -> (i32, i32) {
    %c0_i32 = arith.constant 0 : i32
    %c0_i32_0 = arith.constant 0 : i32
    %c0_i32_1 = arith.constant 0 : i32
    return %c0_i32, %c0_i32_0 : i32, i32
  }
  func.func @transform_6(%arg0: i32) -> (i32, i32) {
    %c0_i32 = arith.constant 0 : i32
    %c0_i32_0 = arith.constant 0 : i32
    %c0_i32_1 = arith.constant 0 : i32
    return %c0_i32, %c0_i32_0 : i32, i32
  }
  func.func @transform_7(%arg0: i32) -> (i32, i32) {
    %c0_i32 = arith.constant 0 : i32
    %c0_i32_0 = arith.constant 0 : i32
    %c0_i32_1 = arith.constant 0 : i32
    return %c0_i32, %c0_i32_0 : i32, i32
  }
  func.func @transform_8(%arg0: i32) -> (i32, i32) {
    %c0_i32 = arith.constant 0 : i32
    %c0_i32_0 = arith.constant 0 : i32
    %c0_i32_1 = arith.constant 0 : i32
    return %c0_i32, %c0_i32_0 : i32, i32
  }
  func.func @transform_9(%arg0: i32) -> (i32, i32) {
    %c0_i32 = arith.constant 0 : i32
    %c0_i32_0 = arith.constant 0 : i32
    return %arg0, %c0_i32 : i32, i32
  }
}

</mosaic_0001>

<llo_original>
// kernel: tpu_custom_call.1
$region0: #{tpu_custom_call.1}
  #allocation0 [shape = 'u32[]', space=smem, size = 0x4, offset = 0x4, fixed_abs, tag = 'smem constant byte address 0x4 - core index']
  #allocation1 [shape = 'u32[144,128]{1,0:T(1,128)}', space=vmem, size = 0x12000, scoped, tag = 'internal scratch']
  %s0 = inlined_call_operand.hbm [shape: bf16[2,1024], index: 0, kind: input, shape index: {}]
  %s1 = inlined_call_operand.hbm [shape: bf16[1024,256], index: 1, kind: input, shape index: {}]
  %s2 = inlined_call_operand.vmem [shape: f32[1,256], index: 2, kind: input, shape index: {}]
  %s3 = inlined_call_operand.hbm [shape: bf16[256,128], index: 3, kind: input, shape index: {}]
  %s4 = inlined_call_operand.vmem [shape: f32[1,128], index: 4, kind: input, shape index: {}]
  %s5 = inlined_call_operand.hbm [shape: bf16[128,128], index: 5, kind: input, shape index: {}]
  %s6 = inlined_call_operand.vmem [shape: f32[1,128], index: 6, kind: input, shape index: {}]
  %s7 = inlined_call_operand.hbm [shape: bf16[128,128], index: 7, kind: input, shape index: {}]
  %s8 = inlined_call_operand.vmem [shape: f32[1,128], index: 8, kind: input, shape index: {}]
  %s9 = inlined_call_operand.hbm [shape: f32[2,128], index: 9, kind: output, shape index: {}]
  %s10 = sld [smem:[#allocation0]]
  $region66: #{tpu_custom_call.1} parent=0
    _
  %s12 = ssub.s32 1, %s10
  %s13 = scalar_select 0, %s12, %s10
  $region1: #{tpu_custom_call.1} parent=0
    #allocation2 [shape = 'u8[4096]{0}', space=vmem, size = 0x1000, scoped, tag = 'input window, operand 0, single buffered']
    #allocation3 [shape = 's32[1]{0}', space=sflag, size = 0x4, scoped, tag = 'scoped memory for tpu_custom_call.1']
    #allocation4 [shape = 's32[1]{0}', space=sflag, size = 0x4, scoped, tag = 'scoped memory for tpu_custom_call.1']
    #allocation5 [shape = 'u8[524288]{0}', space=vmem, size = 0x80000, scoped, tag = 'input window, operand 1, single buffered']
    #allocation6 [shape = 's32[1]{0}', space=sflag, size = 0x4, scoped, tag = 'scoped memory for tpu_custom_call.1']
    #allocation7 [shape = 'u8[65536]{0}', space=vmem, size = 0x10000, scoped, tag = 'input window, operand 3, single buffered']
    #allocation8 [shape = 'u8[32768]{0}', space=vmem, size = 0x8000, scoped, tag = 'input window, operand 5, single buffered']
    #allocation9 [shape = 's32[1]{0}', space=sflag, size = 0x4, scoped, tag = 'scoped memory for tpu_custom_call.1']
    #allocation10 [shape = 'u8[32768]{0}', space=vmem, size = 0x8000, scoped, tag = 'input window, operand 7, single buffered']
    #allocation11 [shape = 'u8[1024]{0}', space=vmem, size = 0x400, scoped, tag = 'output window, operand 0, single buffered']
    %14 = vsyncpa [#allocation3], 0
    %15 = vsyncpa [#allocation6], 0
    %16 = vsyncpa [#allocation9], 0
    %17 = vsyncpa [#allocation4], 0
    // Predicated region
    $region2: #{tpu_custom_call.1} parent=1 // pred_check
      _
    $region3: #{tpu_custom_call.1} parent=1 // pred_check_branch
      %19 = sbr.rel (0) target = $region5
    $region4: #{tpu_custom_call.1} parent=1 // pred_region
      %s21 = ssub.s32 128, 128
      %22 = vsyncadd [#allocation3], %s21
      %s24 = sshll.u32 [#allocation2], 4
      %s25 = int_to_ptr.vmem [resolvable:$true] %s24
      %27 = dma.hbm_to_vmem [thread:$0]  %s0, 128, %s25, [#allocation3]
    $region5: #{tpu_custom_call.1} parent=1 // pred_fallthru
      _
    // Predicated region
    $region6: #{tpu_custom_call.1} parent=1 // pred_check
      _
    $region7: #{tpu_custom_call.1} parent=1 // pred_check_branch
      %29 = sbr.rel (0) target = $region9
    $region8: #{tpu_custom_call.1} parent=1 // pred_region
      %s31 = ssub.s32 16384, 16384
      %32 = vsyncadd [#allocation6], %s31
      %s33 = sshll.u32 [#allocation5], 4
      %s34 = int_to_ptr.vmem [resolvable:$true] %s33
      %39 = dma.hbm_to_vmem [thread:$0]  %s1, 16384, %s34, [#allocation6], 128, 128, 8
    $region9: #{tpu_custom_call.1} parent=1 // pred_fallthru
      _
    // Predicated region
    $region10: #{tpu_custom_call.1} parent=1 // pred_check
      _
    $region11: #{tpu_custom_call.1} parent=1 // pred_check_branch
      %41 = sbr.rel (0) target = $region13
    $region12: #{tpu_custom_call.1} parent=1 // pred_region
      _
    $region13: #{tpu_custom_call.1} parent=1 // pred_fallthru
      _
    // Predicated region
    $region14: #{tpu_custom_call.1} parent=1 // pred_check
      _
    $region15: #{tpu_custom_call.1} parent=1 // pred_check_branch
      %43 = sbr.rel (0) target = $region17
    $region16: #{tpu_custom_call.1} parent=1 // pred_region
      %s45 = ssub.s32 2048, 2048
      %46 = vsyncadd [#allocation6], %s45
      %s47 = sshll.u32 [#allocation7], 4
      %s48 = int_to_ptr.vmem [resolvable:$true] %s47
      %53 = dma.hbm_to_vmem [thread:$0]  %s3, 2048, %s48, [#allocation6], 64, 64, 4
    $region17: #{tpu_custom_call.1} parent=1 // pred_fallthru
      _
    // Predicated region
    $region18: #{tpu_custom_call.1} parent=1 // pred_check
      _
    $region19: #{tpu_custom_call.1} parent=1 // pred_check_branch
      %55 = sbr.rel (0) target = $region21
    $region20: #{tpu_custom_call.1} parent=1 // pred_region
      _
    $region21: #{tpu_custom_call.1} parent=1 // pred_fallthru
      _
    // Predicated region
    $region22: #{tpu_custom_call.1} parent=1 // pred_check
      _
    $region23: #{tpu_custom_call.1} parent=1 // pred_check_branch
      %57 = sbr.rel (0) target = $region25
    $region24: #{tpu_custom_call.1} parent=1 // pred_region
      %s59 = ssub.s32 1024, 1024
      %60 = vsyncadd [#allocation9], %s59
      %s61 = sshll.u32 [#allocation8], 4
      %s62 = int_to_ptr.vmem [resolvable:$true] %s61
      %67 = dma.hbm_to_vmem [thread:$0]  %s5, 1024, %s62, [#allocation9], 64, 64, 4
    $region25: #{tpu_custom_call.1} parent=1 // pred_fallthru
      _
    // Predicated region
    $region26: #{tpu_custom_call.1} parent=1 // pred_check
      _
    $region27: #{tpu_custom_call.1} parent=1 // pred_check_branch
      %69 = sbr.rel (0) target = $region29
    $region28: #{tpu_custom_call.1} parent=1 // pred_region
      _
    $region29: #{tpu_custom_call.1} parent=1 // pred_fallthru
      _
    // Predicated region
    $region30: #{tpu_custom_call.1} parent=1 // pred_check
      _
    $region31: #{tpu_custom_call.1} parent=1 // pred_check_branch
      %71 = sbr.rel (0) target = $region33
    $region32: #{tpu_custom_call.1} parent=1 // pred_region
      %s73 = ssub.s32 1024, 1024
      %74 = vsyncadd [#allocation9], %s73
      %s75 = sshll.u32 [#allocation10], 4
      %s76 = int_to_ptr.vmem [resolvable:$true] %s75
      %81 = dma.hbm_to_vmem [thread:$0]  %s7, 1024, %s76, [#allocation9], 64, 64, 4
    $region33: #{tpu_custom_call.1} parent=1 // pred_fallthru
      _
    // Predicated region
    $region34: #{tpu_custom_call.1} parent=1 // pred_check
      _
    $region35: #{tpu_custom_call.1} parent=1 // pred_check_branch
      %83 = sbr.rel (0) target = $region37
    $region36: #{tpu_custom_call.1} parent=1 // pred_region
      _
    $region37: #{tpu_custom_call.1} parent=1 // pred_fallthru
      _
    // Predicated region
    $region38: #{tpu_custom_call.1} parent=1 // pred_check
      _
    $region39: #{tpu_custom_call.1} parent=1 // pred_check_branch
      %85 = sbr.rel (0) target = $region41
    $region40: #{tpu_custom_call.1} parent=1 // pred_region
      %86 = dma.done [#allocation3], 128
    $region41: #{tpu_custom_call.1} parent=1 // pred_fallthru
      _
    // Predicated region
    $region42: #{tpu_custom_call.1} parent=1 // pred_check
      _
    $region43: #{tpu_custom_call.1} parent=1 // pred_check_branch
      %88 = sbr.rel (0) target = $region45
    $region44: #{tpu_custom_call.1} parent=1 // pred_region
      %89 = dma.done [#allocation6], 16384
    $region45: #{tpu_custom_call.1} parent=1 // pred_fallthru
      _
    // Predicated region
    $region46: #{tpu_custom_call.1} parent=1 // pred_check
      _
    $region47: #{tpu_custom_call.1} parent=1 // pred_check_branch
      %91 = sbr.rel (0) target = $region49
    $region48: #{tpu_custom_call.1} parent=1 // pred_region
      %92 = dma.done [#allocation6], 2048
    $region49: #{tpu_custom_call.1} parent=1 // pred_fallthru
      _
    // Predicated region
    $region50: #{tpu_custom_call.1} parent=1 // pred_check
      _
    $region51: #{tpu_custom_call.1} parent=1 // pred_check_branch
      %94 = sbr.rel (0) target = $region53
    $region52: #{tpu_custom_call.1} parent=1 // pred_region
      %95 = dma.done [#allocation9], 1024
    $region53: #{tpu_custom_call.1} parent=1 // pred_fallthru
      _
    // Predicated region
    $region54: #{tpu_custom_call.1} parent=1 // pred_check
      _
    $region55: #{tpu_custom_call.1} parent=1 // pred_check_branch
      %97 = sbr.rel (0) target = $region57
    $region56: #{tpu_custom_call.1} parent=1 // pred_region
      %98 = dma.done [#allocation9], 1024
    $region57: #{tpu_custom_call.1} parent=1 // pred_fallthru
      _
    %v100 = vld [vmem:[#allocation2] sm:$0xff]
    %v101 = vld [vmem:[#allocation5] sm:$0xff]
    %v102 = vld [vmem:[#allocation5 + $0x8] sm:$0xff]
    %v103 = vld [vmem:[#allocation5 + $0x10] sm:$0xff]
    %v104 = vld [vmem:[#allocation5 + $0x18] sm:$0xff]
    %v105 = vld [vmem:[#allocation5 + $0x20] sm:$0xff]
    %v106 = vld [vmem:[#allocation5 + $0x28] sm:$0xff]
    %v107 = vld [vmem:[#allocation5 + $0x30] sm:$0xff]
    %v108 = vld [vmem:[#allocation5 + $0x38] sm:$0xff]
    %v109 = vld [vmem:[#allocation5 + $0x40] sm:$0xff]
    %v110 = vld [vmem:[#allocation5 + $0x48] sm:$0xff]
    %v111 = vld [vmem:[#allocation5 + $0x50] sm:$0xff]
    %v112 = vld [vmem:[#allocation5 + $0x58] sm:$0xff]
    %v113 = vld [vmem:[#allocation5 + $0x60] sm:$0xff]
    %v114 = vld [vmem:[#allocation5 + $0x68] sm:$0xff]
    %v115 = vld [vmem:[#allocation5 + $0x70] sm:$0xff]
    %v116 = vld [vmem:[#allocation5 + $0x78] sm:$0xff]
    %v117 = vld [vmem:[#allocation5 + $0x80] sm:$0xff]
    %v118 = vld [vmem:[#allocation5 + $0x88] sm:$0xff]
    %v119 = vld [vmem:[#allocation5 + $0x90] sm:$0xff]
    %v120 = vld [vmem:[#allocation5 + $0x98] sm:$0xff]
    %v121 = vld [vmem:[#allocation5 + $0xa0] sm:$0xff]
    %v122 = vld [vmem:[#allocation5 + $0xa8] sm:$0xff]
    %v123 = vld [vmem:[#allocation5 + $0xb0] sm:$0xff]
    %v124 = vld [vmem:[#allocation5 + $0xb8] sm:$0xff]
    %v125 = vld [vmem:[#allocation5 + $0xc0] sm:$0xff]
    %v126 = vld [vmem:[#allocation5 + $0xc8] sm:$0xff]
    %v127 = vld [vmem:[#allocation5 + $0xd0] sm:$0xff]
    %v128 = vld [vmem:[#allocation5 + $0xd8] sm:$0xff]
    %v129 = vld [vmem:[#allocation5 + $0xe0] sm:$0xff]
    %v130 = vld [vmem:[#allocation5 + $0xe8] sm:$0xff]
    %v131 = vld [vmem:[#allocation5 + $0xf0] sm:$0xff]
    %v132 = vld [vmem:[#allocation5 + $0xf8] sm:$0xff]
    %v133 = vld [vmem:[#allocation5 + $0x100] sm:$0xff]
    %v134 = vld [vmem:[#allocation5 + $0x108] sm:$0xff]
    %v135 = vld [vmem:[#allocation5 + $0x110] sm:$0xff]
    %v136 = vld [vmem:[#allocation5 + $0x118] sm:$0xff]
    %v137 = vld [vmem:[#allocation5 + $0x120] sm:$0xff]
    %v138 = vld [vmem:[#allocation5 + $0x128] sm:$0xff]
    %v139 = vld [vmem:[#allocation5 + $0x130] sm:$0xff]
    %v140 = vld [vmem:[#allocation5 + $0x138] sm:$0xff]
    %v141 = vld [vmem:[#allocation5 + $0x140] sm:$0xff]
    %v142 = vld [vmem:[#allocation5 + $0x148] sm:$0xff]
    %v143 = vld [vmem:[#allocation5 + $0x150] sm:$0xff]
    %v144 = vld [vmem:[#allocation5 + $0x158] sm:$0xff]
    %v145 = vld [vmem:[#allocation5 + $0x160] sm:$0xff]
    %v146 = vld [vmem:[#allocation5 + $0x168] sm:$0xff]
    %v147 = vld [vmem:[#allocation5 + $0x170] sm:$0xff]
    %v148 = vld [vmem:[#allocation5 + $0x178] sm:$0xff]
    %v149 = vld [vmem:[#allocation5 + $0x180] sm:$0xff]
    %v150 = vld [vmem:[#allocation5 + $0x188] sm:$0xff]
    %v151 = vld [vmem:[#allocation5 + $0x190] sm:$0xff]
    %v152 = vld [vmem:[#allocation5 + $0x198] sm:$0xff]
    %v153 = vld [vmem:[#allocation5 + $0x1a0] sm:$0xff]
    %v154 = vld [vmem:[#allocation5 + $0x1a8] sm:$0xff]
    %v155 = vld [vmem:[#allocation5 + $0x1b0] sm:$0xff]
    %v156 = vld [vmem:[#allocation5 + $0x1b8] sm:$0xff]
    %v157 = vld [vmem:[#allocation5 + $0x1c0] sm:$0xff]
    %v158 = vld [vmem:[#allocation5 + $0x1c8] sm:$0xff]
    %v159 = vld [vmem:[#allocation5 + $0x1d0] sm:$0xff]
    %v160 = vld [vmem:[#allocation5 + $0x1d8] sm:$0xff]
    %v161 = vld [vmem:[#allocation5 + $0x1e0] sm:$0xff]
    %v162 = vld [vmem:[#allocation5 + $0x1e8] sm:$0xff]
    %v163 = vld [vmem:[#allocation5 + $0x1f0] sm:$0xff]
    %v164 = vld [vmem:[#allocation5 + $0x1f8] sm:$0xff]
    %v165 = vld [vmem:[#allocation5 + $0x200] sm:$0xff]
    %v166 = vld [vmem:[#allocation5 + $0x208] sm:$0xff]
    %v167 = vld [vmem:[#allocation5 + $0x210] sm:$0xff]
    %v168 = vld [vmem:[#allocation5 + $0x218] sm:$0xff]
    %v169 = vld [vmem:[#allocation5 + $0x220] sm:$0xff]
    %v170 = vld [vmem:[#allocation5 + $0x228] sm:$0xff]
    %v171 = vld [vmem:[#allocation5 + $0x230] sm:$0xff]
    %v172 = vld [vmem:[#allocation5 + $0x238] sm:$0xff]
    %v173 = vld [vmem:[#allocation5 + $0x240] sm:$0xff]
    %v174 = vld [vmem:[#allocation5 + $0x248] sm:$0xff]
    %v175 = vld [vmem:[#allocation5 + $0x250] sm:$0xff]
    %v176 = vld [vmem:[#allocation5 + $0x258] sm:$0xff]
    %v177 = vld [vmem:[#allocation5 + $0x260] sm:$0xff]
    %v178 = vld [vmem:[#allocation5 + $0x268] sm:$0xff]
    %v179 = vld [vmem:[#allocation5 + $0x270] sm:$0xff]
    %v180 = vld [vmem:[#allocation5 + $0x278] sm:$0xff]
    %v181 = vld [vmem:[#allocation5 + $0x280] sm:$0xff]
    %v182 = vld [vmem:[#allocation5 + $0x288] sm:$0xff]
    %v183 = vld [vmem:[#allocation5 + $0x290] sm:$0xff]
    %v184 = vld [vmem:[#allocation5 + $0x298] sm:$0xff]
    %v185 = vld [vmem:[#allocation5 + $0x2a0] sm:$0xff]
    %v186 = vld [vmem:[#allocation5 + $0x2a8] sm:$0xff]
    %v187 = vld [vmem:[#allocation5 + $0x2b0] sm:$0xff]
    %v188 = vld [vmem:[#allocation5 + $0x2b8] sm:$0xff]
    %v189 = vld [vmem:[#allocation5 + $0x2c0] sm:$0xff]
    %v190 = vld [vmem:[#allocation5 + $0x2c8] sm:$0xff]
    %v191 = vld [vmem:[#allocation5 + $0x2d0] sm:$0xff]
    %v192 = vld [vmem:[#allocation5 + $0x2d8] sm:$0xff]
    %v193 = vld [vmem:[#allocation5 + $0x2e0] sm:$0xff]
    %v194 = vld [vmem:[#allocation5 + $0x2e8] sm:$0xff]
    %v195 = vld [vmem:[#allocation5 + $0x2f0] sm:$0xff]
    %v196 = vld [vmem:[#allocation5 + $0x2f8] sm:$0xff]
    %v197 = vld [vmem:[#allocation5 + $0x300] sm:$0xff]
    %v198 = vld [vmem:[#allocation5 + $0x308] sm:$0xff]
    %v199 = vld [vmem:[#allocation5 + $0x310] sm:$0xff]
    %v200 = vld [vmem:[#allocation5 + $0x318] sm:$0xff]
    %v201 = vld [vmem:[#allocation5 + $0x320] sm:$0xff]
    %v202 = vld [vmem:[#allocation5 + $0x328] sm:$0xff]
    %v203 = vld [vmem:[#allocation5 + $0x330] sm:$0xff]
    %v204 = vld [vmem:[#allocation5 + $0x338] sm:$0xff]
    %v205 = vld [vmem:[#allocation5 + $0x340] sm:$0xff]
    %v206 = vld [vmem:[#allocation5 + $0x348] sm:$0xff]
    %v207 = vld [vmem:[#allocation5 + $0x350] sm:$0xff]
    %v208 = vld [vmem:[#allocation5 + $0x358] sm:$0xff]
    %v209 = vld [vmem:[#allocation5 + $0x360] sm:$0xff]
    %v210 = vld [vmem:[#allocation5 + $0x368] sm:$0xff]
    %v211 = vld [vmem:[#allocation5 + $0x370] sm:$0xff]
    %v212 = vld [vmem:[#allocation5 + $0x378] sm:$0xff]
    %v213 = vld [vmem:[#allocation5 + $0x380] sm:$0xff]
    %v214 = vld [vmem:[#allocation5 + $0x388] sm:$0xff]
    %v215 = vld [vmem:[#allocation5 + $0x390] sm:$0xff]
    %v216 = vld [vmem:[#allocation5 + $0x398] sm:$0xff]
    %v217 = vld [vmem:[#allocation5 + $0x3a0] sm:$0xff]
    %v218 = vld [vmem:[#allocation5 + $0x3a8] sm:$0xff]
    %v219 = vld [vmem:[#allocation5 + $0x3b0] sm:$0xff]
    %v220 = vld [vmem:[#allocation5 + $0x3b8] sm:$0xff]
    %v221 = vld [vmem:[#allocation5 + $0x3c0] sm:$0xff]
    %v222 = vld [vmem:[#allocation5 + $0x3c8] sm:$0xff]
    %v223 = vld [vmem:[#allocation5 + $0x3d0] sm:$0xff]
    %v224 = vld [vmem:[#allocation5 + $0x3d8] sm:$0xff]
    %v225 = vld [vmem:[#allocation5 + $0x3e0] sm:$0xff]
    %v226 = vld [vmem:[#allocation5 + $0x3e8] sm:$0xff]
    %v227 = vld [vmem:[#allocation5 + $0x3f0] sm:$0xff]
    %v228 = vld [vmem:[#allocation5 + $0x3f8] sm:$0xff]
    %v229 = vld [vmem:[%s2] sm:$0x3]
    %v231 = vlaneseq
    %v232 = vshrl.u32 %v231, 7
    %v233 = vsub.s32 0, %v232
    %v234 = vrot.slane %v229, %v233
    %v235 = vlaneseq
    %v236 = vshrl.u32 %v235, 7
    %v237 = vsub.s32 1, %v236
    %v238 = vrot.slane %v229, %v237
    %v242 = vcombine.high %v100, %v100
    %v244 = vunpack.c.l.s4 1966171168
    %v245 = vunpack.c.0.s8 %v244
    %v246 = vlaneseq
    %v247 = vshrl.u32 %v246, 7
    %v248 = vsub.s32 %v245, %v247
    %v249 = vrot.slane %v100, %v248
    %v251 = vunpack.c.l.s4 1966171168
    %v252 = vunpack.c.0.s8 %v251
    %v253 = vlaneseq
    %v254 = vshrl.u32 %v253, 7
    %v255 = vsub.s32 %v252, %v254
    %v256 = vrot.slane %v242, %v255
    %v257 = vcombine.high %v249, %v249
    %v258 = vcombine.high %v256, %v256
    %v260 = vunpack.c.l.s4 1966171168
    %v261 = vunpack.c.0.s8 %v260
    %v262 = vlaneseq
    %v263 = vshrl.u32 %v262, 7
    %v264 = vsub.s32 %v261, %v263
    %v265 = vrot.slane %v249, %v264
    %v267 = vunpack.c.l.s4 1966171168
    %v268 = vunpack.c.0.s8 %v267
    %v269 = vlaneseq
    %v270 = vshrl.u32 %v269, 7
    %v271 = vsub.s32 %v268, %v270
    %v272 = vrot.slane %v256, %v271
    %v274 = vunpack.c.l.s4 1966171168
    %v275 = vunpack.c.0.s8 %v274
    %v276 = vlaneseq
    %v277 = vshrl.u32 %v276, 7
    %v278 = vsub.s32 %v275, %v277
    %v279 = vrot.slane %v257, %v278
    %v281 = vunpack.c.l.s4 1966171168
    %v282 = vunpack.c.0.s8 %v281
    %v283 = vlaneseq
    %v284 = vshrl.u32 %v283, 7
    %v285 = vsub.s32 %v282, %v284
    %v286 = vrot.slane %v258, %v285
    %v287 = vcombine.high %v265, %v265
    %v288 = vcombine.high %v272, %v272
    %v289 = vcombine.high %v279, %v279
    %v290 = vcombine.high %v286, %v286
    %v427 = vunpack.c.l.b16 %v101
    %v428 = vunpack.c.h.b16 %v101
    %v429 = vunpack.c.l.b16 %v102
    %v430 = vunpack.c.h.b16 %v102
    %v431 = vunpack.c.l.b16 %v103
    %v432 = vunpack.c.h.b16 %v103
    %v433 = vunpack.c.l.b16 %v104
    %v434 = vunpack.c.h.b16 %v104
    %v435 = vunpack.c.l.b16 %v105
    %v436 = vunpack.c.h.b16 %v105
    %v437 = vunpack.c.l.b16 %v106
    %v438 = vunpack.c.h.b16 %v106
    %v439 = vunpack.c.l.b16 %v107
    %v440 = vunpack.c.h.b16 %v107
    %v441 = vunpack.c.l.b16 %v108
    %v442 = vunpack.c.h.b16 %v108
    %v443 = vunpack.c.l.b16 %v109
    %v444 = vunpack.c.h.b16 %v109
    %v445 = vunpack.c.l.b16 %v110
    %v446 = vunpack.c.h.b16 %v110
    %v447 = vunpack.c.l.b16 %v111
    %v448 = vunpack.c.h.b16 %v111
    %v449 = vunpack.c.l.b16 %v112
    %v450 = vunpack.c.h.b16 %v112
    %v451 = vunpack.c.l.b16 %v113
    %v452 = vunpack.c.h.b16 %v113
    %v453 = vunpack.c.l.b16 %v114
    %v454 = vunpack.c.h.b16 %v114
    %v455 = vunpack.c.l.b16 %v115
    %v456 = vunpack.c.h.b16 %v115
    %v457 = vunpack.c.l.b16 %v116
    %v458 = vunpack.c.h.b16 %v116
    %v459 = vunpack.c.l.b16 %v117
    %v460 = vunpack.c.h.b16 %v117
    %v461 = vunpack.c.l.b16 %v118
    %v462 = vunpack.c.h.b16 %v118
    %v463 = vunpack.c.l.b16 %v119
    %v464 = vunpack.c.h.b16 %v119
    %v465 = vunpack.c.l.b16 %v120
    %v466 = vunpack.c.h.b16 %v120
    %v467 = vunpack.c.l.b16 %v121
    %v468 = vunpack.c.h.b16 %v121
    %v469 = vunpack.c.l.b16 %v122
    %v470 = vunpack.c.h.b16 %v122
    %v471 = vunpack.c.l.b16 %v123
    %v472 = vunpack.c.h.b16 %v123
    %v473 = vunpack.c.l.b16 %v124
    %v474 = vunpack.c.h.b16 %v124
    %v475 = vunpack.c.l.b16 %v125
    %v476 = vunpack.c.h.b16 %v125
    %v477 = vunpack.c.l.b16 %v126
    %v478 = vunpack.c.h.b16 %v126
    %v479 = vunpack.c.l.b16 %v127
    %v480 = vunpack.c.h.b16 %v127
    %v481 = vunpack.c.l.b16 %v128
    %v482 = vunpack.c.h.b16 %v128
    %v483 = vunpack.c.l.b16 %v129
    %v484 = vunpack.c.h.b16 %v129
    %v485 = vunpack.c.l.b16 %v130
    %v486 = vunpack.c.h.b16 %v130
    %v487 = vunpack.c.l.b16 %v131
    %v488 = vunpack.c.h.b16 %v131
    %v489 = vunpack.c.l.b16 %v132
    %v490 = vunpack.c.h.b16 %v132
    %v491 = vunpack.c.l.b16 %v133
    %v492 = vunpack.c.h.b16 %v133
    %v493 = vunpack.c.l.b16 %v134
    %v494 = vunpack.c.h.b16 %v134
    %v495 = vunpack.c.l.b16 %v135
    %v496 = vunpack.c.h.b16 %v135
    %v497 = vunpack.c.l.b16 %v136
    %v498 = vunpack.c.h.b16 %v136
    %v499 = vunpack.c.l.b16 %v137
    %v500 = vunpack.c.h.b16 %v137
    %v501 = vunpack.c.l.b16 %v138
    %v502 = vunpack.c.h.b16 %v138
    %v503 = vunpack.c.l.b16 %v139
    %v504 = vunpack.c.h.b16 %v139
    %v505 = vunpack.c.l.b16 %v140
    %v506 = vunpack.c.h.b16 %v140
    %v507 = vunpack.c.l.b16 %v141
    %v508 = vunpack.c.h.b16 %v141
    %v509 = vunpack.c.l.b16 %v142
    %v510 = vunpack.c.h.b16 %v142
    %v511 = vunpack.c.l.b16 %v143
    %v512 = vunpack.c.h.b16 %v143
    %v513 = vunpack.c.l.b16 %v144
    %v514 = vunpack.c.h.b16 %v144
    %v515 = vunpack.c.l.b16 %v145
    %v516 = vunpack.c.h.b16 %v145
    %v517 = vunpack.c.l.b16 %v146
    %v518 = vunpack.c.h.b16 %v146
    %v519 = vunpack.c.l.b16 %v147
    %v520 = vunpack.c.h.b16 %v147
    %v521 = vunpack.c.l.b16 %v148
    %v522 = vunpack.c.h.b16 %v148
    %v523 = vunpack.c.l.b16 %v149
    %v524 = vunpack.c.h.b16 %v149
    %v525 = vunpack.c.l.b16 %v150
    %v526 = vunpack.c.h.b16 %v150
    %v527 = vunpack.c.l.b16 %v151
    %v528 = vunpack.c.h.b16 %v151
    %v529 = vunpack.c.l.b16 %v152
    %v530 = vunpack.c.h.b16 %v152
    %v531 = vunpack.c.l.b16 %v153
    %v532 = vunpack.c.h.b16 %v153
    %v533 = vunpack.c.l.b16 %v154
    %v534 = vunpack.c.h.b16 %v154
    %v535 = vunpack.c.l.b16 %v155
    %v536 = vunpack.c.h.b16 %v155
    %v537 = vunpack.c.l.b16 %v156
    %v538 = vunpack.c.h.b16 %v156
    %v539 = vunpack.c.l.b16 %v157
    %v540 = vunpack.c.h.b16 %v157
    %v541 = vunpack.c.l.b16 %v158
    %v542 = vunpack.c.h.b16 %v158
    %v543 = vunpack.c.l.b16 %v159
    %v544 = vunpack.c.h.b16 %v159
    %v545 = vunpack.c.l.b16 %v160
    %v546 = vunpack.c.h.b16 %v160
    %v547 = vunpack.c.l.b16 %v161
    %v548 = vunpack.c.h.b16 %v161
    %v549 = vunpack.c.l.b16 %v162
    %v550 = vunpack.c.h.b16 %v162
    %v551 = vunpack.c.l.b16 %v163
    %v552 = vunpack.c.h.b16 %v163
    %v553 = vunpack.c.l.b16 %v164
    %v554 = vunpack.c.h.b16 %v164
    %v555 = vunpack.c.l.b16 %v165
    %v556 = vunpack.c.h.b16 %v165
    %v557 = vunpack.c.l.b16 %v166
    %v558 = vunpack.c.h.b16 %v166
    %v559 = vunpack.c.l.b16 %v167
    %v560 = vunpack.c.h.b16 %v167
    %v561 = vunpack.c.l.b16 %v168
    %v562 = vunpack.c.h.b16 %v168
    %v563 = vunpack.c.l.b16 %v169
    %v564 = vunpack.c.h.b16 %v169
    %v565 = vunpack.c.l.b16 %v170
    %v566 = vunpack.c.h.b16 %v170
    %v567 = vunpack.c.l.b16 %v171
    %v568 = vunpack.c.h.b16 %v171
    %v569 = vunpack.c.l.b16 %v172
    %v570 = vunpack.c.h.b16 %v172
    %v571 = vunpack.c.l.b16 %v173
    %v572 = vunpack.c.h.b16 %v173
    %v573 = vunpack.c.l.b16 %v174
    %v574 = vunpack.c.h.b16 %v174
    %v575 = vunpack.c.l.b16 %v175
    %v576 = vunpack.c.h.b16 %v175
    %v577 = vunpack.c.l.b16 %v176
    %v578 = vunpack.c.h.b16 %v176
    %v579 = vunpack.c.l.b16 %v177
    %v580 = vunpack.c.h.b16 %v177
    %v581 = vunpack.c.l.b16 %v178
    %v582 = vunpack.c.h.b16 %v178
    %v583 = vunpack.c.l.b16 %v179
    %v584 = vunpack.c.h.b16 %v179
    %v585 = vunpack.c.l.b16 %v180
    %v586 = vunpack.c.h.b16 %v180
    %v587 = vunpack.c.l.b16 %v181
    %v588 = vunpack.c.h.b16 %v181
    %v589 = vunpack.c.l.b16 %v182
    %v590 = vunpack.c.h.b16 %v182
    %v591 = vunpack.c.l.b16 %v183
    %v592 = vunpack.c.h.b16 %v183
    %v593 = vunpack.c.l.b16 %v184
    %v594 = vunpack.c.h.b16 %v184
    %v595 = vunpack.c.l.b16 %v185
    %v596 = vunpack.c.h.b16 %v185
    %v597 = vunpack.c.l.b16 %v186
    %v598 = vunpack.c.h.b16 %v186
    %v599 = vunpack.c.l.b16 %v187
    %v600 = vunpack.c.h.b16 %v187
    %v601 = vunpack.c.l.b16 %v188
    %v602 = vunpack.c.h.b16 %v188
    %v603 = vunpack.c.l.b16 %v189
    %v604 = vunpack.c.h.b16 %v189
    %v605 = vunpack.c.l.b16 %v190
    %v606 = vunpack.c.h.b16 %v190
    %v607 = vunpack.c.l.b16 %v191
    %v608 = vunpack.c.h.b16 %v191
    %v609 = vunpack.c.l.b16 %v192
    %v610 = vunpack.c.h.b16 %v192
    %v611 = vunpack.c.l.b16 %v193
    %v612 = vunpack.c.h.b16 %v193
    %v613 = vunpack.c.l.b16 %v194
    %v614 = vunpack.c.h.b16 %v194
    %v615 = vunpack.c.l.b16 %v195
    %v616 = vunpack.c.h.b16 %v195
    %v617 = vunpack.c.l.b16 %v196
    %v618 = vunpack.c.h.b16 %v196
    %v619 = vunpack.c.l.b16 %v197
    %v620 = vunpack.c.h.b16 %v197
    %v621 = vunpack.c.l.b16 %v198
    %v622 = vunpack.c.h.b16 %v198
    %v623 = vunpack.c.l.b16 %v199
    %v624 = vunpack.c.h.b16 %v199
    %v625 = vunpack.c.l.b16 %v200
    %v626 = vunpack.c.h.b16 %v200
    %v627 = vunpack.c.l.b16 %v201
    %v628 = vunpack.c.h.b16 %v201
    %v629 = vunpack.c.l.b16 %v202
    %v630 = vunpack.c.h.b16 %v202
    %v631 = vunpack.c.l.b16 %v203
    %v632 = vunpack.c.h.b16 %v203
    %v633 = vunpack.c.l.b16 %v204
    %v634 = vunpack.c.h.b16 %v204
    %v635 = vunpack.c.l.b16 %v205
    %v636 = vunpack.c.h.b16 %v205
    %v637 = vunpack.c.l.b16 %v206
    %v638 = vunpack.c.h.b16 %v206
    %v639 = vunpack.c.l.b16 %v207
    %v640 = vunpack.c.h.b16 %v207
    %v641 = vunpack.c.l.b16 %v208
    %v642 = vunpack.c.h.b16 %v208
    %v643 = vunpack.c.l.b16 %v209
    %v644 = vunpack.c.h.b16 %v209
    %v645 = vunpack.c.l.b16 %v210
    %v646 = vunpack.c.h.b16 %v210
    %v647 = vunpack.c.l.b16 %v211
    %v648 = vunpack.c.h.b16 %v211
    %v649 = vunpack.c.l.b16 %v212
    %v650 = vunpack.c.h.b16 %v212
    %v651 = vunpack.c.l.b16 %v213
    %v652 = vunpack.c.h.b16 %v213
    %v653 = vunpack.c.l.b16 %v214
    %v654 = vunpack.c.h.b16 %v214
    %v655 = vunpack.c.l.b16 %v215
    %v656 = vunpack.c.h.b16 %v215
    %v657 = vunpack.c.l.b16 %v216
    %v658 = vunpack.c.h.b16 %v216
    %v659 = vunpack.c.l.b16 %v217
    %v660 = vunpack.c.h.b16 %v217
    %v661 = vunpack.c.l.b16 %v218
    %v662 = vunpack.c.h.b16 %v218
    %v663 = vunpack.c.l.b16 %v219
    %v664 = vunpack.c.h.b16 %v219
    %v665 = vunpack.c.l.b16 %v220
    %v666 = vunpack.c.h.b16 %v220
    %v667 = vunpack.c.l.b16 %v221
    %v668 = vunpack.c.h.b16 %v221
    %v669 = vunpack.c.l.b16 %v222
    %v670 = vunpack.c.h.b16 %v222
    %v671 = vunpack.c.l.b16 %v223
    %v672 = vunpack.c.h.b16 %v223
    %v673 = vunpack.c.l.b16 %v224
    %v674 = vunpack.c.h.b16 %v224
    %v675 = vunpack.c.l.b16 %v225
    %v676 = vunpack.c.h.b16 %v225
    %v677 = vunpack.c.l.b16 %v226
    %v678 = vunpack.c.h.b16 %v226
    %v679 = vunpack.c.l.b16 %v227
    %v680 = vunpack.c.h.b16 %v227
    %v681 = vunpack.c.l.b16 %v228
    %v682 = vunpack.c.h.b16 %v228
    %v683 = vpack.c.b16 %v429, %v427
    %v684 = vpack.c.b16 %v430, %v428
    %v685 = vpack.c.b16 %v433, %v431
    %v686 = vpack.c.b16 %v434, %v432
    %v687 = vpack.c.b16 %v437, %v435
    %v688 = vpack.c.b16 %v438, %v436
    %v689 = vpack.c.b16 %v441, %v439
    %v690 = vpack.c.b16 %v442, %v440
    %v691 = vpack.c.b16 %v445, %v443
    %v692 = vpack.c.b16 %v446, %v444
    %v693 = vpack.c.b16 %v449, %v447
    %v694 = vpack.c.b16 %v450, %v448
    %v695 = vpack.c.b16 %v453, %v451
    %v696 = vpack.c.b16 %v454, %v452
    %v697 = vpack.c.b16 %v457, %v455
    %v698 = vpack.c.b16 %v458, %v456
    %v699 = vpack.c.b16 %v461, %v459
    %v700 = vpack.c.b16 %v462, %v460
    %v701 = vpack.c.b16 %v465, %v463
    %v702 = vpack.c.b16 %v466, %v464
    %v703 = vpack.c.b16 %v469, %v467
    %v704 = vpack.c.b16 %v470, %v468
    %v705 = vpack.c.b16 %v473, %v471
    %v706 = vpack.c.b16 %v474, %v472
    %v707 = vpack.c.b16 %v477, %v475
    %v708 = vpack.c.b16 %v478, %v476
    %v709 = vpack.c.b16 %v481, %v479
    %v710 = vpack.c.b16 %v482, %v480
    %v711 = vpack.c.b16 %v485, %v483
    %v712 = vpack.c.b16 %v486, %v484
    %v713 = vpack.c.b16 %v489, %v487
    %v714 = vpack.c.b16 %v490, %v488
    %v715 = vpack.c.b16 %v493, %v491
    %v716 = vpack.c.b16 %v494, %v492
    %v717 = vpack.c.b16 %v497, %v495
    %v718 = vpack.c.b16 %v498, %v496
    %v719 = vpack.c.b16 %v501, %v499
    %v720 = vpack.c.b16 %v502, %v500
    %v721 = vpack.c.b16 %v505, %v503
    %v722 = vpack.c.b16 %v506, %v504
    %v723 = vpack.c.b16 %v509, %v507
    %v724 = vpack.c.b16 %v510, %v508
    %v725 = vpack.c.b16 %v513, %v511
    %v726 = vpack.c.b16 %v514, %v512
    %v727 = vpack.c.b16 %v517, %v515
    %v728 = vpack.c.b16 %v518, %v516
    %v729 = vpack.c.b16 %v521, %v519
    %v730 = vpack.c.b16 %v522, %v520
    %v731 = vpack.c.b16 %v525, %v523
    %v732 = vpack.c.b16 %v526, %v524
    %v733 = vpack.c.b16 %v529, %v527
    %v734 = vpack.c.b16 %v530, %v528
    %v735 = vpack.c.b16 %v533, %v531
    %v736 = vpack.c.b16 %v534, %v532
    %v737 = vpack.c.b16 %v537, %v535
    %v738 = vpack.c.b16 %v538, %v536
    %v739 = vpack.c.b16 %v541, %v539
    %v740 = vpack.c.b16 %v542, %v540
    %v741 = vpack.c.b16 %v545, %v543
    %v742 = vpack.c.b16 %v546, %v544
    %v743 = vpack.c.b16 %v549, %v547
    %v744 = vpack.c.b16 %v550, %v548
    %v745 = vpack.c.b16 %v553, %v551
    %v746 = vpack.c.b16 %v554, %v552
    %v747 = vpack.c.b16 %v557, %v555
    %v748 = vpack.c.b16 %v558, %v556
    %v749 = vpack.c.b16 %v561, %v559
    %v750 = vpack.c.b16 %v562, %v560
    %v751 = vpack.c.b16 %v565, %v563
    %v752 = vpack.c.b16 %v566, %v564
    %v753 = vpack.c.b16 %v569, %v567
    %v754 = vpack.c.b16 %v570, %v568
    %v755 = vpack.c.b16 %v573, %v571
    %v756 = vpack.c.b16 %v574, %v572
    %v757 = vpack.c.b16 %v577, %v575
    %v758 = vpack.c.b16 %v578, %v576
    %v759 = vpack.c.b16 %v581, %v579
    %v760 = vpack.c.b16 %v582, %v580
    %v761 = vpack.c.b16 %v585, %v583
    %v762 = vpack.c.b16 %v586, %v584
    %v763 = vpack.c.b16 %v589, %v587
    %v764 = vpack.c.b16 %v590, %v588
    %v765 = vpack.c.b16 %v593, %v591
    %v766 = vpack.c.b16 %v594, %v592
    %v767 = vpack.c.b16 %v597, %v595
    %v768 = vpack.c.b16 %v598, %v596
    %v769 = vpack.c.b16 %v601, %v599
    %v770 = vpack.c.b16 %v602, %v600
    %v771 = vpack.c.b16 %v605, %v603
    %v772 = vpack.c.b16 %v606, %v604
    %v773 = vpack.c.b16 %v609, %v607
    %v774 = vpack.c.b16 %v610, %v608
    %v775 = vpack.c.b16 %v613, %v611
    %v776 = vpack.c.b16 %v614, %v612
    %v777 = vpack.c.b16 %v617, %v615
    %v778 = vpack.c.b16 %v618, %v616
    %v779 = vpack.c.b16 %v621, %v619
    %v780 = vpack.c.b16 %v622, %v620
    %v781 = vpack.c.b16 %v625, %v623
    %v782 = vpack.c.b16 %v626, %v624
    %v783 = vpack.c.b16 %v629, %v627
    %v784 = vpack.c.b16 %v630, %v628
    %v785 = vpack.c.b16 %v633, %v631
    %v786 = vpack.c.b16 %v634, %v632
    %v787 = vpack.c.b16 %v637, %v635
    %v788 = vpack.c.b16 %v638, %v636
    %v789 = vpack.c.b16 %v641, %v639
    %v790 = vpack.c.b16 %v642, %v640
    %v791 = vpack.c.b16 %v645, %v643
    %v792 = vpack.c.b16 %v646, %v644
    %v793 = vpack.c.b16 %v649, %v647
    %v794 = vpack.c.b16 %v650, %v648
    %v795 = vpack.c.b16 %v653, %v651
    %v796 = vpack.c.b16 %v654, %v652
    %v797 = vpack.c.b16 %v657, %v655
    %v798 = vpack.c.b16 %v658, %v656
    %v799 = vpack.c.b16 %v661, %v659
    %v800 = vpack.c.b16 %v662, %v660
    %v801 = vpack.c.b16 %v665, %v663
    %v802 = vpack.c.b16 %v666, %v664
    %v803 = vpack.c.b16 %v669, %v667
    %v804 = vpack.c.b16 %v670, %v668
    %v805 = vpack.c.b16 %v673, %v671
    %v806 = vpack.c.b16 %v674, %v672
    %v807 = vpack.c.b16 %v677, %v675
    %v808 = vpack.c.b16 %v678, %v676
    %v809 = vpack.c.b16 %v681, %v679
    %v810 = vpack.c.b16 %v682, %v680
    %939 = vmatprep.subr.bf16.mxu0 %v684
    %940 = vmatpush1.bf16.msra.mxu0 %v683
    %941 = vmatprep.subr.bf16.mxu0 %v686
    %942 = vmatpush1.bf16.msra.mxu0 %v685
    %943 = vmatprep.subr.bf16.mxu0 %v688
    %944 = vmatpush1.bf16.msra.mxu0 %v687
    %945 = vmatprep.subr.bf16.mxu0 %v690
    %946 = vmatpush1.bf16.msra.mxu0 %v689
    %947 = vmatprep.subr.bf16.mxu0 %v692
    %948 = vmatpush1.bf16.msra.mxu0 %v691
    %949 = vmatprep.subr.bf16.mxu0 %v694
    %950 = vmatpush1.bf16.msra.mxu0 %v693
    %951 = vmatprep.subr.bf16.mxu0 %v696
    %952 = vmatpush1.bf16.msra.mxu0 %v695
    %953 = vmatprep.subr.bf16.mxu0 %v698
    %954 = vmatpush1.bf16.msra.mxu0 %v697
    %955 = vmatprep.subr.bf16.mxu0 %v700
    %956 = vmatpush1.bf16.msra.mxu0 %v699
    %957 = vmatprep.subr.bf16.mxu0 %v702
    %958 = vmatpush1.bf16.msra.mxu0 %v701
    %959 = vmatprep.subr.bf16.mxu0 %v704
    %960 = vmatpush1.bf16.msra.mxu0 %v703
    %961 = vmatprep.subr.bf16.mxu0 %v706
    %962 = vmatpush1.bf16.msra.mxu0 %v705
    %963 = vmatprep.subr.bf16.mxu0 %v708
    %964 = vmatpush1.bf16.msra.mxu0 %v707
    %965 = vmatprep.subr.bf16.mxu0 %v710
    %966 = vmatpush1.bf16.msra.mxu0 %v709
    %967 = vmatprep.subr.bf16.mxu0 %v712
    %968 = vmatpush1.bf16.msra.mxu0 %v711
    %969 = vmatprep.subr.bf16.mxu0 %v714
    %970 = vmatpush1.bf16.msra.mxu0 %v713
    %971 = vmatprep.mubr.bf16.mxu0 %v279
    %972 = vmatmul.mubr.bf16.gmra.mrb[0].mxu0 %v265
    %v973 = vpop.f32.mrb[0].mxu0
    %v974 = vadd.f32 %v234, %v973
    %v975 = vpop.f32.mrb[0].mxu0
    %v976 = vadd.f32 %v238, %v975
    %v977 = vpop.f32.mrb[0].mxu0
    %v978 = vpop.f32.mrb[0].mxu0
    %979 = vdwg.mxu0
    %980 = vmatprep.subr.bf16.mxu0 %v716
    %981 = vmatpush1.bf16.msra.mxu0 %v715
    %982 = vmatprep.subr.bf16.mxu0 %v718
    %983 = vmatpush1.bf16.msra.mxu0 %v717
    %984 = vmatprep.subr.bf16.mxu0 %v720
    %985 = vmatpush1.bf16.msra.mxu0 %v719
    %986 = vmatprep.subr.bf16.mxu0 %v722
    %987 = vmatpush1.bf16.msra.mxu0 %v721
    %988 = vmatprep.subr.bf16.mxu0 %v724
    %989 = vmatpush1.bf16.msra.mxu0 %v723
    %990 = vmatprep.subr.bf16.mxu0 %v726
    %991 = vmatpush1.bf16.msra.mxu0 %v725
    %992 = vmatprep.subr.bf16.mxu0 %v728
    %993 = vmatpush1.bf16.msra.mxu0 %v727
    %994 = vmatprep.subr.bf16.mxu0 %v730
    %995 = vmatpush1.bf16.msra.mxu0 %v729
    %996 = vmatprep.subr.bf16.mxu0 %v732
    %997 = vmatpush1.bf16.msra.mxu0 %v731
    %998 = vmatprep.subr.bf16.mxu0 %v734
    %999 = vmatpush1.bf16.msra.mxu0 %v733
    %1000 = vmatprep.subr.bf16.mxu0 %v736
    %1001 = vmatpush1.bf16.msra.mxu0 %v735
    %1002 = vmatprep.subr.bf16.mxu0 %v738
    %1003 = vmatpush1.bf16.msra.mxu0 %v737
    %1004 = vmatprep.subr.bf16.mxu0 %v740
    %1005 = vmatpush1.bf16.msra.mxu0 %v739
    %1006 = vmatprep.subr.bf16.mxu0 %v742
    %1007 = vmatpush1.bf16.msra.mxu0 %v741
    %1008 = vmatprep.subr.bf16.mxu0 %v744
    %1009 = vmatpush1.bf16.msra.mxu0 %v743
    %1010 = vmatprep.subr.bf16.mxu0 %v746
    %1011 = vmatpush1.bf16.msra.mxu0 %v745
    %1012 = vmatprep.mubr.bf16.mxu0 %v289
    %1013 = vmatmul.mubr.bf16.gmra.mrb[0].mxu0 %v287
    %v1014 = vpop.f32.mrb[0].mxu0
    %v1015 = vadd.f32 %v974, %v1014
    %v1016 = vpop.f32.mrb[0].mxu0
    %v1017 = vadd.f32 %v976, %v1016
    %v1018 = vpop.f32.mrb[0].mxu0
    %v1019 = vpop.f32.mrb[0].mxu0
    %1020 = vdwg.mxu0
    %1021 = vmatprep.subr.bf16.mxu0 %v748
    %1022 = vmatpush1.bf16.msra.mxu0 %v747
    %1023 = vmatprep.subr.bf16.mxu0 %v750
    %1024 = vmatpush1.bf16.msra.mxu0 %v749
    %1025 = vmatprep.subr.bf16.mxu0 %v752
    %1026 = vmatpush1.bf16.msra.mxu0 %v751
    %1027 = vmatprep.subr.bf16.mxu0 %v754
    %1028 = vmatpush1.bf16.msra.mxu0 %v753
    %1029 = vmatprep.subr.bf16.mxu0 %v756
    %1030 = vmatpush1.bf16.msra.mxu0 %v755
    %1031 = vmatprep.subr.bf16.mxu0 %v758
    %1032 = vmatpush1.bf16.msra.mxu0 %v757
    %1033 = vmatprep.subr.bf16.mxu0 %v760
    %1034 = vmatpush1.bf16.msra.mxu0 %v759
    %1035 = vmatprep.subr.bf16.mxu0 %v762
    %1036 = vmatpush1.bf16.msra.mxu0 %v761
    %1037 = vmatprep.subr.bf16.mxu0 %v764
    %1038 = vmatpush1.bf16.msra.mxu0 %v763
    %1039 = vmatprep.subr.bf16.mxu0 %v766
    %1040 = vmatpush1.bf16.msra.mxu0 %v765
    %1041 = vmatprep.subr.bf16.mxu0 %v768
    %1042 = vmatpush1.bf16.msra.mxu0 %v767
    %1043 = vmatprep.subr.bf16.mxu0 %v770
    %1044 = vmatpush1.bf16.msra.mxu0 %v769
    %1045 = vmatprep.subr.bf16.mxu0 %v772
    %1046 = vmatpush1.bf16.msra.mxu0 %v771
    %1047 = vmatprep.subr.bf16.mxu0 %v774
    %1048 = vmatpush1.bf16.msra.mxu0 %v773
    %1049 = vmatprep.subr.bf16.mxu0 %v776
    %1050 = vmatpush1.bf16.msra.mxu0 %v775
    %1051 = vmatprep.subr.bf16.mxu0 %v778
    %1052 = vmatpush1.bf16.msra.mxu0 %v777
    %1053 = vmatprep.mubr.bf16.mxu0 %v286
    %1054 = vmatmul.mubr.bf16.gmra.mrb[0].mxu0 %v272
    %v1055 = vpop.f32.mrb[0].mxu0
    %v1056 = vadd.f32 %v1015, %v1055
    %v1057 = vpop.f32.mrb[0].mxu0
    %v1058 = vadd.f32 %v1017, %v1057
    %v1059 = vpop.f32.mrb[0].mxu0
    %v1060 = vpop.f32.mrb[0].mxu0
    %1061 = vdwg.mxu0
    %1062 = vmatprep.subr.bf16.mxu0 %v780
    %1063 = vmatpush1.bf16.msra.mxu0 %v779
    %1064 = vmatprep.subr.bf16.mxu0 %v782
    %1065 = vmatpush1.bf16.msra.mxu0 %v781
    %1066 = vmatprep.subr.bf16.mxu0 %v784
    %1067 = vmatpush1.bf16.msra.mxu0 %v783
    %1068 = vmatprep.subr.bf16.mxu0 %v786
    %1069 = vmatpush1.bf16.msra.mxu0 %v785
    %1070 = vmatprep.subr.bf16.mxu0 %v788
    %1071 = vmatpush1.bf16.msra.mxu0 %v787
    %1072 = vmatprep.subr.bf16.mxu0 %v790
    %1073 = vmatpush1.bf16.msra.mxu0 %v789
    %1074 = vmatprep.subr.bf16.mxu0 %v792
    %1075 = vmatpush1.bf16.msra.mxu0 %v791
    %1076 = vmatprep.subr.bf16.mxu0 %v794
    %1077 = vmatpush1.bf16.msra.mxu0 %v793
    %1078 = vmatprep.subr.bf16.mxu0 %v796
    %1079 = vmatpush1.bf16.msra.mxu0 %v795
    %1080 = vmatprep.subr.bf16.mxu0 %v798
    %1081 = vmatpush1.bf16.msra.mxu0 %v797
    %1082 = vmatprep.subr.bf16.mxu0 %v800
    %1083 = vmatpush1.bf16.msra.mxu0 %v799
    %1084 = vmatprep.subr.bf16.mxu0 %v802
    %1085 = vmatpush1.bf16.msra.mxu0 %v801
    %1086 = vmatprep.subr.bf16.mxu0 %v804
    %1087 = vmatpush1.bf16.msra.mxu0 %v803
    %1088 = vmatprep.subr.bf16.mxu0 %v806
    %1089 = vmatpush1.bf16.msra.mxu0 %v805
    %1090 = vmatprep.subr.bf16.mxu0 %v808
    %1091 = vmatpush1.bf16.msra.mxu0 %v807
    %1092 = vmatprep.subr.bf16.mxu0 %v810
    %1093 = vmatpush1.bf16.msra.mxu0 %v809
    %1094 = vmatprep.mubr.bf16.mxu0 %v290
    %1095 = vmatmul.mubr.bf16.gmra.mrb[0].mxu0 %v288
    %v1096 = vpop.f32.mrb[0].mxu0
    %v1097 = vadd.f32 %v1056, %v1096
    %v1098 = vpop.f32.mrb[0].mxu0
    %v1099 = vadd.f32 %v1058, %v1098
    %v1100 = vpop.f32.mrb[0].mxu0
    %v1101 = vpop.f32.mrb[0].mxu0
    %1102 = vdwg.mxu0
    %v1103 = vmax.f32 %v1097, 0.0
    %v1104 = vmax.f32 %v1099, 0.0
    %v1105 = vpack.c.bf16 %v1103, %v1103
    %v1106 = vpack.c.bf16 %v1104, %v1104
    %v1107 = vld [vmem:[#allocation7] sm:$0xf]
    %v1108 = vld [vmem:[#allocation7 + $0x4] sm:$0xf]
    %v1109 = vld [vmem:[#allocation7 + $0x8] sm:$0xf]
    %v1110 = vld [vmem:[#allocation7 + $0xc] sm:$0xf]
    %v1111 = vld [vmem:[#allocation7 + $0x10] sm:$0xf]
    %v1112 = vld [vmem:[#allocation7 + $0x14] sm:$0xf]
    %v1113 = vld [vmem:[#allocation7 + $0x18] sm:$0xf]
    %v1114 = vld [vmem:[#allocation7 + $0x1c] sm:$0xf]
    %v1115 = vld [vmem:[#allocation7 + $0x20] sm:$0xf]
    %v1116 = vld [vmem:[#allocation7 + $0x24] sm:$0xf]
    %v1117 = vld [vmem:[#allocation7 + $0x28] sm:$0xf]
    %v1118 = vld [vmem:[#allocation7 + $0x2c] sm:$0xf]
    %v1119 = vld [vmem:[#allocation7 + $0x30] sm:$0xf]
    %v1120 = vld [vmem:[#allocation7 + $0x34] sm:$0xf]
    %v1121 = vld [vmem:[#allocation7 + $0x38] sm:$0xf]
    %v1122 = vld [vmem:[#allocation7 + $0x3c] sm:$0xf]
    %v1123 = vld [vmem:[#allocation7 + $0x40] sm:$0xf]
    %v1124 = vld [vmem:[#allocation7 + $0x44] sm:$0xf]
    %v1125 = vld [vmem:[#allocation7 + $0x48] sm:$0xf]
    %v1126 = vld [vmem:[#allocation7 + $0x4c] sm:$0xf]
    %v1127 = vld [vmem:[#allocation7 + $0x50] sm:$0xf]
    %v1128 = vld [vmem:[#allocation7 + $0x54] sm:$0xf]
    %v1129 = vld [vmem:[#allocation7 + $0x58] sm:$0xf]
    %v1130 = vld [vmem:[#allocation7 + $0x5c] sm:$0xf]
    %v1131 = vld [vmem:[#allocation7 + $0x60] sm:$0xf]
    %v1132 = vld [vmem:[#allocation7 + $0x64] sm:$0xf]
    %v1133 = vld [vmem:[#allocation7 + $0x68] sm:$0xf]
    %v1134 = vld [vmem:[#allocation7 + $0x6c] sm:$0xf]
    %v1135 = vld [vmem:[#allocation7 + $0x70] sm:$0xf]
    %v1136 = vld [vmem:[#allocation7 + $0x74] sm:$0xf]
    %v1137 = vld [vmem:[#allocation7 + $0x78] sm:$0xf]
    %v1138 = vld [vmem:[#allocation7 + $0x7c] sm:$0xf]
    %v1139 = vld [vmem:[%s4] sm:$0x1]
    %v1141 = vlaneseq
    %v1142 = vshrl.u32 %v1141, 7
    %v1143 = vsub.s32 0, %v1142
    %v1144 = vrot.slane %v1139, %v1143
    %v1178 = vunpack.c.l.b16 %v1107
    %v1179 = vunpack.c.l.b16 %v1108
    %v1180 = vunpack.c.l.b16 %v1109
    %v1181 = vunpack.c.l.b16 %v1110
    %v1182 = vunpack.c.l.b16 %v1111
    %v1183 = vunpack.c.l.b16 %v1112
    %v1184 = vunpack.c.l.b16 %v1113
    %v1185 = vunpack.c.l.b16 %v1114
    %v1186 = vunpack.c.l.b16 %v1115
    %v1187 = vunpack.c.l.b16 %v1116
    %v1188 = vunpack.c.l.b16 %v1117
    %v1189 = vunpack.c.l.b16 %v1118
    %v1190 = vunpack.c.l.b16 %v1119
    %v1191 = vunpack.c.l.b16 %v1120
    %v1192 = vunpack.c.l.b16 %v1121
    %v1193 = vunpack.c.l.b16 %v1122
    %v1194 = vunpack.c.l.b16 %v1123
    %v1195 = vunpack.c.l.b16 %v1124
    %v1196 = vunpack.c.l.b16 %v1125
    %v1197 = vunpack.c.l.b16 %v1126
    %v1198 = vunpack.c.l.b16 %v1127
    %v1199 = vunpack.c.l.b16 %v1128
    %v1200 = vunpack.c.l.b16 %v1129
    %v1201 = vunpack.c.l.b16 %v1130
    %v1202 = vunpack.c.l.b16 %v1131
    %v1203 = vunpack.c.l.b16 %v1132
    %v1204 = vunpack.c.l.b16 %v1133
    %v1205 = vunpack.c.l.b16 %v1134
    %v1206 = vunpack.c.l.b16 %v1135
    %v1207 = vunpack.c.l.b16 %v1136
    %v1208 = vunpack.c.l.b16 %v1137
    %v1209 = vunpack.c.l.b16 %v1138
    %v1210 = vpack.c.b16 %v1179, %v1178
    %v1211 = vpack.c.b16 %v1181, %v1180
    %v1212 = vpack.c.b16 %v1183, %v1182
    %v1213 = vpack.c.b16 %v1185, %v1184
    %v1214 = vpack.c.b16 %v1187, %v1186
    %v1215 = vpack.c.b16 %v1189, %v1188
    %v1216 = vpack.c.b16 %v1191, %v1190
    %v1217 = vpack.c.b16 %v1193, %v1192
    %v1218 = vpack.c.b16 %v1195, %v1194
    %v1219 = vpack.c.b16 %v1197, %v1196
    %v1220 = vpack.c.b16 %v1199, %v1198
    %v1221 = vpack.c.b16 %v1201, %v1200
    %v1222 = vpack.c.b16 %v1203, %v1202
    %v1223 = vpack.c.b16 %v1205, %v1204
    %v1224 = vpack.c.b16 %v1207, %v1206
    %v1225 = vpack.c.b16 %v1209, %v1208
    %1242 = vmatprep.subr.bf16.mxu0 0
    %1243 = vmatpush1.bf16.msra.mxu0 %v1210
    %1244 = vmatprep.subr.bf16.mxu0 0
    %1245 = vmatpush1.bf16.msra.mxu0 %v1211
    %1246 = vmatprep.subr.bf16.mxu0 0
    %1247 = vmatpush1.bf16.msra.mxu0 %v1212
    %1248 = vmatprep.subr.bf16.mxu0 0
    %1249 = vmatpush1.bf16.msra.mxu0 %v1213
    %1250 = vmatprep.subr.bf16.mxu0 0
    %1251 = vmatpush1.bf16.msra.mxu0 %v1214
    %1252 = vmatprep.subr.bf16.mxu0 0
    %1253 = vmatpush1.bf16.msra.mxu0 %v1215
    %1254 = vmatprep.subr.bf16.mxu0 0
    %1255 = vmatpush1.bf16.msra.mxu0 %v1216
    %1256 = vmatprep.subr.bf16.mxu0 0
    %1257 = vmatpush1.bf16.msra.mxu0 %v1217
    %1258 = vmatprep.subr.bf16.mxu0 0
    %1259 = vmatpush1.bf16.msra.mxu0 %v1218
    %1260 = vmatprep.subr.bf16.mxu0 0
    %1261 = vmatpush1.bf16.msra.mxu0 %v1219
    %1262 = vmatprep.subr.bf16.mxu0 0
    %1263 = vmatpush1.bf16.msra.mxu0 %v1220
    %1264 = vmatprep.subr.bf16.mxu0 0
    %1265 = vmatpush1.bf16.msra.mxu0 %v1221
    %1266 = vmatprep.subr.bf16.mxu0 0
    %1267 = vmatpush1.bf16.msra.mxu0 %v1222
    %1268 = vmatprep.subr.bf16.mxu0 0
    %1269 = vmatpush1.bf16.msra.mxu0 %v1223
    %1270 = vmatprep.subr.bf16.mxu0 0
    %1271 = vmatpush1.bf16.msra.mxu0 %v1224
    %1272 = vmatprep.subr.bf16.mxu0 0
    %1273 = vmatpush1.bf16.msra.mxu0 %v1225
    %1274 = vmatprep.mubr.bf16.mxu0 %v1106
    %1275 = vmatmul.mubr.bf16.gmra.mrb[0].mxu0 %v1105
    %v1276 = vpop.f32.mrb[0].mxu0
    %v1277 = vadd.f32 %v1144, %v1276
    %v1278 = vpop.f32.mrb[0].mxu0
    %v1279 = vpop.f32.mrb[0].mxu0
    %v1280 = vpop.f32.mrb[0].mxu0
    %1281 = vdwg.mxu0
    %v1282 = vmax.f32 %v1277, 0.0
    %v1283 = vpack.c.bf16 %v1282, %v1282
    %v1284 = vld [vmem:[#allocation8] sm:$0xf]
    %v1285 = vld [vmem:[#allocation8 + $0x4] sm:$0xf]
    %v1286 = vld [vmem:[#allocation8 + $0x8] sm:$0xf]
    %v1287 = vld [vmem:[#allocation8 + $0xc] sm:$0xf]
    %v1288 = vld [vmem:[#allocation8 + $0x10] sm:$0xf]
    %v1289 = vld [vmem:[#allocation8 + $0x14] sm:$0xf]
    %v1290 = vld [vmem:[#allocation8 + $0x18] sm:$0xf]
    %v1291 = vld [vmem:[#allocation8 + $0x1c] sm:$0xf]
    %v1292 = vld [vmem:[#allocation8 + $0x20] sm:$0xf]
    %v1293 = vld [vmem:[#allocation8 + $0x24] sm:$0xf]
    %v1294 = vld [vmem:[#allocation8 + $0x28] sm:$0xf]
    %v1295 = vld [vmem:[#allocation8 + $0x2c] sm:$0xf]
    %v1296 = vld [vmem:[#allocation8 + $0x30] sm:$0xf]
    %v1297 = vld [vmem:[#allocation8 + $0x34] sm:$0xf]
    %v1298 = vld [vmem:[#allocation8 + $0x38] sm:$0xf]
    %v1299 = vld [vmem:[#allocation8 + $0x3c] sm:$0xf]
    %v1300 = vld [vmem:[%s6] sm:$0x1]
    %v1302 = vlaneseq
    %v1303 = vshrl.u32 %v1302, 7
    %v1304 = vsub.s32 0, %v1303
    %v1305 = vrot.slane %v1300, %v1304
    %v1323 = vunpack.c.l.b16 %v1284
    %v1324 = vunpack.c.l.b16 %v1285
    %v1325 = vunpack.c.l.b16 %v1286
    %v1326 = vunpack.c.l.b16 %v1287
    %v1327 = vunpack.c.l.b16 %v1288
    %v1328 = vunpack.c.l.b16 %v1289
    %v1329 = vunpack.c.l.b16 %v1290
    %v1330 = vunpack.c.l.b16 %v1291
    %v1331 = vunpack.c.l.b16 %v1292
    %v1332 = vunpack.c.l.b16 %v1293
    %v1333 = vunpack.c.l.b16 %v1294
    %v1334 = vunpack.c.l.b16 %v1295
    %v1335 = vunpack.c.l.b16 %v1296
    %v1336 = vunpack.c.l.b16 %v1297
    %v1337 = vunpack.c.l.b16 %v1298
    %v1338 = vunpack.c.l.b16 %v1299
    %v1339 = vpack.c.b16 %v1324, %v1323
    %v1340 = vpack.c.b16 %v1326, %v1325
    %v1341 = vpack.c.b16 %v1328, %v1327
    %v1342 = vpack.c.b16 %v1330, %v1329
    %v1343 = vpack.c.b16 %v1332, %v1331
    %v1344 = vpack.c.b16 %v1334, %v1333
    %v1345 = vpack.c.b16 %v1336, %v1335
    %v1346 = vpack.c.b16 %v1338, %v1337
    %1355 = vmatprep.subr.bf16.mxu0 0
    %1356 = vmatpush1.bf16.msra.mxu0 %v1339
    %1357 = vmatprep.subr.bf16.mxu0 0
    %1358 = vmatpush1.bf16.msra.mxu0 %v1340
    %1359 = vmatprep.subr.bf16.mxu0 0
    %1360 = vmatpush1.bf16.msra.mxu0 %v1341
    %1361 = vmatprep.subr.bf16.mxu0 0
    %1362 = vmatpush1.bf16.msra.mxu0 %v1342
    %1363 = vmatprep.subr.bf16.mxu0 0
    %1364 = vmatpush1.bf16.msra.mxu0 %v1343
    %1365 = vmatprep.subr.bf16.mxu0 0
    %1366 = vmatpush1.bf16.msra.mxu0 %v1344
    %1367 = vmatprep.subr.bf16.mxu0 0
    %1368 = vmatpush1.bf16.msra.mxu0 %v1345
    %1369 = vmatprep.subr.bf16.mxu0 0
    %1370 = vmatpush1.bf16.msra.mxu0 %v1346
    %1371 = vmatprep.subr.bf16.mxu0 0
    %1372 = vmatpush1.bf16.msra.mxu0 0
    %1373 = vmatprep.subr.bf16.mxu0 0
    %1374 = vmatpush1.bf16.msra.mxu0 0
    %1375 = vmatprep.subr.bf16.mxu0 0
    %1376 = vmatpush1.bf16.msra.mxu0 0
    %1377 = vmatprep.subr.bf16.mxu0 0
    %1378 = vmatpush1.bf16.msra.mxu0 0
    %1379 = vmatprep.subr.bf16.mxu0 0
    %1380 = vmatpush1.bf16.msra.mxu0 0
    %1381 = vmatprep.subr.bf16.mxu0 0
    %1382 = vmatpush1.bf16.msra.mxu0 0
    %1383 = vmatprep.subr.bf16.mxu0 0
    %1384 = vmatpush1.bf16.msra.mxu0 0
    %1385 = vmatprep.subr.bf16.mxu0 0
    %1386 = vmatpush1.bf16.msra.mxu0 0
    %1387 = vmatprep.mubr.bf16.mxu0 0
    %1388 = vmatmul.mubr.bf16.gmra.mrb[0].mxu0 %v1283
    %v1389 = vpop.f32.mrb[0].mxu0
    %v1390 = vadd.f32 %v1305, %v1389
    %v1391 = vpop.f32.mrb[0].mxu0
    %v1392 = vpop.f32.mrb[0].mxu0
    %v1393 = vpop.f32.mrb[0].mxu0
    %1394 = vdwg.mxu0
    %v1395 = vmax.f32 %v1390, 0.0
    %v1396 = vpack.c.bf16 %v1395, %v1395
    %v1397 = vld [vmem:[#allocation10] sm:$0xf]
    %v1398 = vld [vmem:[#allocation10 + $0x4] sm:$0xf]
    %v1399 = vld [vmem:[#allocation10 + $0x8] sm:$0xf]
    %v1400 = vld [vmem:[#allocation10 + $0xc] sm:$0xf]
    %v1401 = vld [vmem:[#allocation10 + $0x10] sm:$0xf]
    %v1402 = vld [vmem:[#allocation10 + $0x14] sm:$0xf]
    %v1403 = vld [vmem:[#allocation10 + $0x18] sm:$0xf]
    %v1404 = vld [vmem:[#allocation10 + $0x1c] sm:$0xf]
    %v1405 = vld [vmem:[#allocation10 + $0x20] sm:$0xf]
    %v1406 = vld [vmem:[#allocation10 + $0x24] sm:$0xf]
    %v1407 = vld [vmem:[#allocation10 + $0x28] sm:$0xf]
    %v1408 = vld [vmem:[#allocation10 + $0x2c] sm:$0xf]
    %v1409 = vld [vmem:[#allocation10 + $0x30] sm:$0xf]
    %v1410 = vld [vmem:[#allocation10 + $0x34] sm:$0xf]
    %v1411 = vld [vmem:[#allocation10 + $0x38] sm:$0xf]
    %v1412 = vld [vmem:[#allocation10 + $0x3c] sm:$0xf]
    %v1413 = vld [vmem:[%s8] sm:$0x1]
    %v1415 = vlaneseq
    %v1416 = vshrl.u32 %v1415, 7
    %v1417 = vsub.s32 0, %v1416
    %v1418 = vrot.slane %v1413, %v1417
    %v1436 = vunpack.c.l.b16 %v1397
    %v1437 = vunpack.c.l.b16 %v1398
    %v1438 = vunpack.c.l.b16 %v1399
    %v1439 = vunpack.c.l.b16 %v1400
    %v1440 = vunpack.c.l.b16 %v1401
    %v1441 = vunpack.c.l.b16 %v1402
    %v1442 = vunpack.c.l.b16 %v1403
    %v1443 = vunpack.c.l.b16 %v1404
    %v1444 = vunpack.c.l.b16 %v1405
    %v1445 = vunpack.c.l.b16 %v1406
    %v1446 = vunpack.c.l.b16 %v1407
    %v1447 = vunpack.c.l.b16 %v1408
    %v1448 = vunpack.c.l.b16 %v1409
    %v1449 = vunpack.c.l.b16 %v1410
    %v1450 = vunpack.c.l.b16 %v1411
    %v1451 = vunpack.c.l.b16 %v1412
    %v1452 = vpack.c.b16 %v1437, %v1436
    %v1453 = vpack.c.b16 %v1439, %v1438
    %v1454 = vpack.c.b16 %v1441, %v1440
    %v1455 = vpack.c.b16 %v1443, %v1442
    %v1456 = vpack.c.b16 %v1445, %v1444
    %v1457 = vpack.c.b16 %v1447, %v1446
    %v1458 = vpack.c.b16 %v1449, %v1448
    %v1459 = vpack.c.b16 %v1451, %v1450
    %1468 = vmatprep.subr.bf16.mxu0 0
    %1469 = vmatpush1.bf16.msra.mxu0 %v1452
    %1470 = vmatprep.subr.bf16.mxu0 0
    %1471 = vmatpush1.bf16.msra.mxu0 %v1453
    %1472 = vmatprep.subr.bf16.mxu0 0
    %1473 = vmatpush1.bf16.msra.mxu0 %v1454
    %1474 = vmatprep.subr.bf16.mxu0 0
    %1475 = vmatpush1.bf16.msra.mxu0 %v1455
    %1476 = vmatprep.subr.bf16.mxu0 0
    %1477 = vmatpush1.bf16.msra.mxu0 %v1456
    %1478 = vmatprep.subr.bf16.mxu0 0
    %1479 = vmatpush1.bf16.msra.mxu0 %v1457
    %1480 = vmatprep.subr.bf16.mxu0 0
    %1481 = vmatpush1.bf16.msra.mxu0 %v1458
    %1482 = vmatprep.subr.bf16.mxu0 0
    %1483 = vmatpush1.bf16.msra.mxu0 %v1459
    %1484 = vmatprep.subr.bf16.mxu0 0
    %1485 = vmatpush1.bf16.msra.mxu0 0
    %1486 = vmatprep.subr.bf16.mxu0 0
    %1487 = vmatpush1.bf16.msra.mxu0 0
    %1488 = vmatprep.subr.bf16.mxu0 0
    %1489 = vmatpush1.bf16.msra.mxu0 0
    %1490 = vmatprep.subr.bf16.mxu0 0
    %1491 = vmatpush1.bf16.msra.mxu0 0
    %1492 = vmatprep.subr.bf16.mxu0 0
    %1493 = vmatpush1.bf16.msra.mxu0 0
    %1494 = vmatprep.subr.bf16.mxu0 0
    %1495 = vmatpush1.bf16.msra.mxu0 0
    %1496 = vmatprep.subr.bf16.mxu0 0
    %1497 = vmatpush1.bf16.msra.mxu0 0
    %1498 = vmatprep.subr.bf16.mxu0 0
    %1499 = vmatpush1.bf16.msra.mxu0 0
    %1500 = vmatprep.mubr.bf16.mxu0 0
    %1501 = vmatmul.mubr.bf16.gmra.mrb[0].mxu0 %v1396
    %v1502 = vpop.f32.mrb[0].mxu0
    %v1503 = vadd.f32 %v1418, %v1502
    %v1504 = vpop.f32.mrb[0].mxu0
    %v1505 = vpop.f32.mrb[0].mxu0
    %v1506 = vpop.f32.mrb[0].mxu0
    %1507 = vdwg.mxu0
    %v1508 = vsub.f32 0.0, %v1503
    %v1509 = vmul.f32 %v1508, 1.442695
    %v1510 = vpow.pop %v1509
    %v1511 = vadd.f32 %v1510, 1.0
    %v1512 = vrcp.pop %v1511
    %1513 = vst [vmem:[#allocation11] sm:$0x3] %v1512
    // Predicated region
    $region58: #{tpu_custom_call.1} parent=1 // pred_check
      _
    $region59: #{tpu_custom_call.1} parent=1 // pred_check_branch
      %1515 = sbr.rel (0) target = $region61
    $region60: #{tpu_custom_call.1} parent=1 // pred_region
      %s1517 = ssub.s32 32, 32
      %1518 = vsyncadd [#allocation4], %s1517
      %s1520 = sshll.u32 [#allocation11], 4
      %s1521 = int_to_ptr.vmem [resolvable:$true] %s1520
      %1523 = dma.vmem_to_hbm [thread:$0]  %s1521, 32, %s9, [#allocation4]
    $region61: #{tpu_custom_call.1} parent=1 // pred_fallthru
      _
    // Predicated region
    $region62: #{tpu_custom_call.1} parent=1 // pred_check
      _
    $region63: #{tpu_custom_call.1} parent=1 // pred_check_branch
      %1525 = sbr.rel (0) target = $region65
    $region64: #{tpu_custom_call.1} parent=1 // pred_region
      %1526 = dma.done [#allocation4], 32
    $region65: #{tpu_custom_call.1} parent=1 // pred_fallthru
      _
    %1527 = vsyncpa [#allocation3], 1
    %1528 = vsyncpa [#allocation6], 1
    %1529 = vsyncpa [#allocation9], 1
    %1530 = vsyncpa [#allocation4], 1

</llo_original>
